<compile_context>
chip_gen: v7x
topology: tpu7x:2x2x1
jax: 0.10.0
libtpu: 0.0.40
codegen_flags: <defaults>
</compile_context>

<pallas_src>
import functools

import numpy as np
import jax
import jax.numpy as jnp
from jax.experimental import pallas as pl
from jax.experimental.pallas import tpu as pltpu

LANE = 128
SUBLANE = 8
TARGET_BLOCK_BYTES = 4 * 1024 * 1024   # ~4 MiB of payload per grid step
MIN_SPLIT_BYTES = 1024 * 1024          # split single-block tensors >= 1 MiB (v7x megacore)

# Hardware PRNG only lowers on real TPU; keep a counter-hash fallback so the
# kernel also runs under interpret / non-TPU backends for correctness tests.
_USE_HW_PRNG = jax.default_backend() == "tpu"


def _fmix32(h):
    """murmur3 32-bit finalizer — fallback randomness for non-TPU backends."""
    h = h ^ (h >> jnp.uint32(16))
    h = h * jnp.uint32(0x85EBCA6B)
    h = h ^ (h >> jnp.uint32(13))
    h = h * jnp.uint32(0xC2B2AE35)
    h = h ^ (h >> jnp.uint32(16))
    return h


def _random_bits_hw(seed_ref, shape):
    """One hardware vrng draw per block; mask depends only on (seed, block)."""
    block_seed = seed_ref[0] + pl.program_id(0) * jnp.int32(982451653)
    pltpu.prng_seed(block_seed)
    # bitcast -> uint32 regardless of the (int32/uint32) dtype prng returns.
    return pltpu.bitcast(pltpu.prng_random_bits(shape), jnp.uint32)


def _random_bits_hash(seed_ref, shape):
    """Counter-based hash of the global element index (interpret fallback).

    NOTE: the u32 flat index wraps at 2^32 elements (~16 GiB f32); only the
    fallback path is affected — the hardware-PRNG path has no counter.
    """
    row = jax.lax.broadcasted_iota(jnp.int32, shape, 0).astype(jnp.uint32)
    col = jax.lax.broadcasted_iota(jnp.int32, shape, 1).astype(jnp.uint32)
    base = (pl.program_id(0) * shape[0]).astype(jnp.uint32)
    idx = (base + row) * jnp.uint32(LANE) + col
    seed = seed_ref[0].astype(jnp.uint32)
    return _fmix32(idx ^ (seed * jnp.uint32(0x9E3779B9)))


def _dropout_kernel(seed_ref, x_ref, o_ref, *, p, use_hw_prng):
    """Inverted dropout on one (block_rows, 128) block."""
    x = x_ref[...]
    if use_hw_prng:
        bits = _random_bits_hw(seed_ref, x.shape)
    else:
        bits = _random_bits_hash(seed_ref, x.shape)

    # keep iff bits >= thresh ;  P(bits < thresh) = thresh / 2^32 ≈ p.
    thresh = jnp.uint32(min(int(p * 4294967296.0), 0xFFFFFFFF))
    keep = bits >= thresh

    # Scale in f32 (PyTorch scales by a float scalar), cast once on the way out.
    scale = 1.0 / (1.0 - p)
    y = x.astype(jnp.float32) * scale
    o_ref[...] = jnp.where(keep, y, 0.0).astype(o_ref.dtype)


def _choose_block_rows(rows, itemsize):
    """Dtype-aware block sizing: ~4 MiB blocks, packed-sublane aligned."""
    packed = SUBLANE * max(1, 4 // itemsize)             # 8 f32 / 16 bf16 / 32 int8
    target = TARGET_BLOCK_BYTES // (LANE * itemsize)
    target = max(packed, (target // packed) * packed)
    if rows > target:
        return target
    # Whole tensor fits in one block: split in two so v7x can shard the
    # parallel grid axis across both TensorCores, but only when each half's
    # HBM time dwarfs the ~0.35 us per-step overhead.
    if rows * LANE * itemsize >= MIN_SPLIT_BYTES and rows >= 2 * packed:
        half = -(-rows // 2)
        half = -(-half // packed) * packed
        return min(rows, half)
    return rows


def _dropout_2d(x2d, seed_arr, p):
    """Dropout over a lane-dense (rows, 128) slab with large tiled blocks."""
    rows = x2d.shape[0]
    block_rows = _choose_block_rows(rows, x2d.dtype.itemsize)
    grid = pl.cdiv(rows, block_rows)

    kernel = functools.partial(_dropout_kernel, p=float(p),
                               use_hw_prng=_USE_HW_PRNG)
    return pl.pallas_call(
        kernel,
        out_shape=jax.ShapeDtypeStruct(x2d.shape, x2d.dtype),
        grid_spec=pltpu.PrefetchScalarGridSpec(
            num_scalar_prefetch=1,  # seed lands in SMEM
            grid=(grid,),
            in_specs=[pl.BlockSpec((block_rows, LANE), lambda i, seed: (i, 0))],
            out_specs=pl.BlockSpec((block_rows, LANE), lambda i, seed: (i, 0)),
        ),
        compiler_params=pltpu.CompilerParams(
            # Blocks are independent -> shard across both TCs on v7x.
            dimension_semantics=("parallel",),
            # 2x double-buffered 4 MiB in + out blocks plus elementwise
            # temporaries; explicit so v5e's 16 MiB scoped default never
            # rejects the larger blocks and v7x (64 MiB physical) never spills.
            vmem_limit_bytes=48 * 1024 * 1024,
        ),
    )(seed_arr, x2d)


def dense_dropout(x, p, training, seed):
    """nn.Dropout(p) equivalent for an arbitrarily-shaped dense array."""
    if (not training) or p <= 0.0:
        return x
    if p >= 1.0:
        # scale = 1/(1-p) would be inf; PyTorch returns all zeros here.
        return jnp.zeros_like(x)

    n = x.size
    seed_arr = jnp.asarray([seed], dtype=jnp.int32)

    if n % LANE == 0:
        # Free (layout-preserving) reshape to a lane-dense slab: exactly one
        # HBM read + one HBM write of the data.
        x2d = x.reshape(n // LANE, LANE)
        return _dropout_2d(x2d, seed_arr, p).reshape(x.shape)

    # Ragged tail (e.g. sparse nnz not a multiple of 128): pad to a lane
    # multiple, process, slice back.
    # TODO(synk): mask the ragged tail in-kernel (1-D grid + in-kernel tail
    # mask) to avoid this extra pad/slice HBM pass for large unaligned inputs.
    flat = x.reshape(-1)
    pad = (-n) % LANE
    flat = jnp.pad(flat, (0, pad))
    y2d = _dropout_2d(flat.reshape(-1, LANE), seed_arr, p)
    return y2d.reshape(-1)[:n].reshape(x.shape)


def sparse_dropout(indices, values, shape, p, training, seed):
    """SparseDropout equivalent: dropout on COO values, indices unchanged."""
    new_values = dense_dropout(values, p, training, seed)
    return indices, new_values, shape


class MixedDropout:
    """JAX/Pallas mirror of the PyTorch MixedDropout module."""

    def __init__(self, p):
        self.p = float(p)
        self.training = True

    def __call__(self, x, seed=0):
        # Sparse inputs are passed as an (indices, values, shape) triple
        # (assumed pre-coalesced).
        if isinstance(x, tuple) and len(x) == 3:
            indices, values, shape = x
            return sparse_dropout(indices, values, shape,
                                  self.p, self.training, seed)
        return dense_dropout(x, self.p, self.training, seed)


if __name__ == "__main__":
    key = jax.random.PRNGKey(0)
    k_dense, k_vals = jax.random.split(key)

    p = 0.5
    module = MixedDropout(p)

    # ---- dense path (NCHW) ----
    x = jax.random.normal(k_dense, (2, 4, 16, 16), dtype=jnp.float32)
    y = jax.block_until_ready(module(x, seed=1234))
    assert y.shape == x.shape and y.dtype == x.dtype
    # kept elements are exactly x / (1 - p), dropped are exactly 0
    kept = np.asarray(y) != 0
    np.testing.assert_allclose(
        np.asarray(y)[kept], np.asarray(x / (1.0 - p))[kept], rtol=1e-6)
    frac_kept = kept.mean()
    assert 0.3 < frac_kept < 0.7, f"keep fraction {frac_kept} far from 1-p"

    # different seeds give different masks; same seed is deterministic
    y2 = jax.block_until_ready(module(x, seed=1234))
    np.testing.assert_array_equal(np.asarray(y), np.asarray(y2))
    y3 = jax.block_until_ready(module(x, seed=4321))
    assert not np.array_equal(np.asarray(y), np.asarray(y3))

    # ---- sparse path (COO: indices [2, nnz], values [nnz], dense shape) ----
    nnz = 12
    idx = jnp.stack([
        jnp.arange(nnz, dtype=jnp.int32) % 8,
        (jnp.arange(nnz, dtype=jnp.int32) * 3) % 8,
    ])
    vals = jax.random.normal(k_vals, (nnz,), dtype=jnp.float32)
    sp = (idx, vals, (8, 8))
    out_idx, out_vals, out_shape = module(sp, seed=42)
    out_vals = jax.block_until_ready(out_vals)
    assert out_idx.shape == idx.shape
    assert out_vals.shape == vals.shape
    assert out_shape == (8, 8)
    kept_v = np.asarray(out_vals) != 0
    np.testing.assert_allclose(
        np.asarray(out_vals)[kept_v],
        np.asarray(vals / (1.0 - p))[kept_v], rtol=1e-6)

    # ---- eval mode: identity ----
    module.training = False
    y_eval = jax.block_until_ready(module(x, seed=7))
    np.testing.assert_allclose(np.asarray(y_eval), np.asarray(x))

    print("KERNEL_OK")
</pallas_src>

<mosaic_0001>
module attributes {stable_mosaic.version = 11 : i64} {
  func.func @_dropout_kernel(%arg0: i32, %arg1: memref<1xi32, #tpu.memory_space<smem>>, %arg2: memref<16x128xf32, #tpu.memory_space<vmem>>, %arg3: memref<16x128xf32, #tpu.memory_space<vmem>>) attributes {dimension_semantics = [#tpu.dimension_semantics<parallel>], iteration_bounds = array<i64: 1>, scalar_prefetch = 1 : i64, scratch_operands = 0 : i64, tpu.core_type = #tpu.core_type<tc>, window_params = [{transform_indices = @transform_0, window_bounds = array<i64: 16, 128>}, {transform_indices = @transform_1, window_bounds = array<i64: 16, 128>}]} {
    %c0 = arith.constant 0 : index
    %c0_0 = arith.constant 0 : index
    %0 = vector.load %arg2[%c0, %c0_0] : memref<16x128xf32, #tpu.memory_space<vmem>>, vector<16x128xf32>
    %1 = tpu.iota {dimensions = array<i32: 0>} : vector<16x128xi32>
    %2 = tpu.iota {dimensions = array<i32: 1>} : vector<16x128xi32>
    %c16_i32 = arith.constant 16 : i32
    %3 = arith.muli %arg0, %c16_i32 : i32
    %4 = vector.broadcast %3 : i32 to vector<16x128xi32>
    %5 = arith.addi %4, %1 : vector<16x128xi32>
    %c128_i32 = arith.constant 128 : i32
    %6 = vector.broadcast %c128_i32 : i32 to vector<16x128xi32>
    %7 = arith.muli %5, %6 : vector<16x128xi32>
    %8 = arith.addi %7, %2 : vector<16x128xi32>
    %c0_1 = arith.constant 0 : index
    %9 = memref.load %arg1[%c0_1] : memref<1xi32, #tpu.memory_space<smem>>
    %c-1640531527_i32 = arith.constant -1640531527 : i32
    %10 = arith.muli %9, %c-1640531527_i32 : i32
    %11 = vector.broadcast %10 : i32 to vector<16x128xi32>
    %12 = arith.xori %8, %11 : vector<16x128xi32>
    %c16_i32_2 = arith.constant 16 : i32
    %13 = vector.broadcast %c16_i32_2 : i32 to vector<16x128xi32>
    %14 = arith.shrui %12, %13 : vector<16x128xi32>
    %15 = arith.xori %12, %14 : vector<16x128xi32>
    %c-2048144789_i32 = arith.constant -2048144789 : i32
    %16 = vector.broadcast %c-2048144789_i32 : i32 to vector<16x128xi32>
    %17 = arith.muli %15, %16 : vector<16x128xi32>
    %c13_i32 = arith.constant 13 : i32
    %18 = vector.broadcast %c13_i32 : i32 to vector<16x128xi32>
    %19 = arith.shrui %17, %18 : vector<16x128xi32>
    %20 = arith.xori %17, %19 : vector<16x128xi32>
    %c-1028477387_i32 = arith.constant -1028477387 : i32
    %21 = vector.broadcast %c-1028477387_i32 : i32 to vector<16x128xi32>
    %22 = arith.muli %20, %21 : vector<16x128xi32>
    %c16_i32_3 = arith.constant 16 : i32
    %23 = vector.broadcast %c16_i32_3 : i32 to vector<16x128xi32>
    %24 = arith.shrui %22, %23 : vector<16x128xi32>
    %25 = arith.xori %22, %24 : vector<16x128xi32>
    %c-2147483648_i32 = arith.constant -2147483648 : i32
    %26 = vector.broadcast %c-2147483648_i32 : i32 to vector<16x128xi32>
    %27 = arith.cmpi uge, %25, %26 : vector<16x128xi32>
    %cst = arith.constant 2.000000e+00 : f32
    %28 = vector.broadcast %cst : f32 to vector<16x128xf32>
    %29 = arith.mulf %0, %28 : vector<16x128xf32>
    %cst_4 = arith.constant 0.000000e+00 : f32
    %30 = vector.broadcast %cst_4 : f32 to vector<16x128xf32>
    %31 = arith.select %27, %29, %30 : vector<16x128xi1>, vector<16x128xf32>
    %c0_5 = arith.constant 0 : index
    %c0_6 = arith.constant 0 : index
    %32 = vector.load %arg3[%c0_5, %c0_6] : memref<16x128xf32, #tpu.memory_space<vmem>>, vector<16x128xf32>
    tpu.vector_store %arg3[%c0_5, %c0_6], %31 {strides = array<i32>} : memref<16x128xf32, #tpu.memory_space<vmem>>, vector<16x128xf32>,
    return
  }
  func.func @transform_0(%arg0: i32, %arg1: memref<1xi32, #tpu.memory_space<smem>>) -> (i32, i32) {
    %c0_i32 = arith.constant 0 : i32
    %c0_i32_0 = arith.constant 0 : i32
    return %arg0, %c0_i32 : i32, i32
  }
  func.func @transform_1(%arg0: i32, %arg1: memref<1xi32, #tpu.memory_space<smem>>) -> (i32, i32) {
    %c0_i32 = arith.constant 0 : i32
    %c0_i32_0 = arith.constant 0 : i32
    return %arg0, %c0_i32 : i32, i32
  }
}

</mosaic_0001>

<llo_original>
// kernel: tpu_custom_call.1
$region0: #{tpu_custom_call.1}
  #allocation0 [shape = 'u32[]', space=smem, size = 0x4, offset = 0x4, fixed_abs, tag = 'smem constant byte address 0x4 - core index']
  #allocation1 [shape = 'u32[144,128]{1,0:T(1,128)}', space=vmem, size = 0x12000, scoped, tag = 'internal scratch']
  #allocation2 [shape = 's32[1]{0}', space=sflag, size = 0x4, scoped, tag = 'scoped memory for tpu_custom_call.1']
  #allocation3 [shape = 's32[1]{0:T(128)S(6)}', space=smem, size = 0x200, scoped, tag = 'prefetched SMEM operand 0']
  %s0 = inlined_call_operand.<no memory space> [shape: s32[1], index: 0, kind: input, shape index: {}]
  %s1 = inlined_call_operand.hbm [shape: f32[16,128], index: 1, kind: input, shape index: {}]
  %s2 = inlined_call_operand.hbm [shape: f32[16,128], index: 2, kind: output, shape index: {}]
  %s3 = sld [smem:[#allocation0]]
  $region18: #{tpu_custom_call.1} parent=0
    _
  %s5 = ssub.s32 1, %s3
  %s6 = scalar_select 0, %s5, %s3
  %7 = sst [smem:[#allocation3]] %s0
  $region1: #{tpu_custom_call.1} parent=0
    #allocation4 [shape = 'u8[8192]{0}', space=vmem, size = 0x2000, scoped, tag = 'input window, operand 1, single buffered']
    #allocation5 [shape = 's32[1]{0}', space=sflag, size = 0x4, scoped, tag = 'scoped memory for tpu_custom_call.1']
    #allocation6 [shape = 's32[1]{0}', space=sflag, size = 0x4, scoped, tag = 'scoped memory for tpu_custom_call.1']
    #allocation7 [shape = 'u8[8192]{0}', space=vmem, size = 0x2000, scoped, tag = 'output window, operand 0, single buffered']
    %8 = vsyncpa [#allocation5], 0
    %9 = vsyncpa [#allocation6], 0
    // Predicated region
    $region2: #{tpu_custom_call.1} parent=1 // pred_check
      _
    $region3: #{tpu_custom_call.1} parent=1 // pred_check_branch
      %11 = sbr.rel (0) target = $region5
    $region4: #{tpu_custom_call.1} parent=1 // pred_region
      %s13 = ssub.s32 256, 256
      %14 = vsyncadd [#allocation5], %s13
      %s15 = sshll.u32 [#allocation4], 4
      %s16 = int_to_ptr.vmem [resolvable:$true] %s15
      %21 = dma.hbm_to_vmem [thread:$0]  %s1, 256, %s16, [#allocation5], 128, 128, 8
    $region5: #{tpu_custom_call.1} parent=1 // pred_fallthru
      _
    // Predicated region
    $region6: #{tpu_custom_call.1} parent=1 // pred_check
      _
    $region7: #{tpu_custom_call.1} parent=1 // pred_check_branch
      %23 = sbr.rel (0) target = $region9
    $region8: #{tpu_custom_call.1} parent=1 // pred_region
      %24 = dma.done [#allocation5], 256
    $region9: #{tpu_custom_call.1} parent=1 // pred_fallthru
      _
    %v25 = vld [vmem:[#allocation4] sm:$0xff]
    %v26 = vld [vmem:[#allocation4 + $0x8] sm:$0xff]
    %v27 = vlaneseq
    %v28 = vshrl.u32 %v27, 7
    %v29 = vadd.s32 %v28, 8
    %v30 = vlaneseq
    %v31 = vand.u32 %v30, 127
    %s32 = smul.u32 0, 16
    %v33 = vstv %s32
    %v34 = vadd.s32 %v33, %v28
    %v35 = vadd.s32 %v33, %v29
    %v36 = vmul.u32 %v34, 128
    %v37 = vmul.u32 %v35, 128
    %v38 = vadd.s32 %v36, %v31
    %v39 = vadd.s32 %v37, %v31
    %s40 = sld [smem:[#allocation3]]
    %s41 = smul.u32 %s40, 2654435769
    %v42 = vstv %s41
    %v43 = vxor.u32 %v38, %v42
    %v44 = vxor.u32 %v39, %v42
    %v45 = vshrl.u32 %v43, 16
    %v46 = vshrl.u32 %v44, 16
    %v47 = vxor.u32 %v43, %v45
    %v48 = vxor.u32 %v44, %v46
    %v49 = vmul.u32 %v47, 2246822507
    %v50 = vmul.u32 %v48, 2246822507
    %v51 = vshrl.u32 %v49, 13
    %v52 = vshrl.u32 %v50, 13
    %v53 = vxor.u32 %v49, %v51
    %v54 = vxor.u32 %v50, %v52
    %v55 = vmul.u32 %v53, 3266489909
    %v56 = vmul.u32 %v54, 3266489909
    %v57 = vshrl.u32 %v55, 16
    %v58 = vshrl.u32 %v56, 16
    %v59 = vxor.u32 %v55, %v57
    %v60 = vxor.u32 %v56, %v58
    %vm61 = vcmp.ge.u32.totalorder %v59, 2147483648
    %vm62 = vcmp.ge.u32.totalorder %v60, 2147483648
    %v63 = vmul.f32 %v25, 2.0
    %v64 = vmul.f32 %v26, 2.0
    %v65 = vsel %vm61, %v63, 0.0
    %v66 = vsel %vm62, %v64, 0.0
    %67 = vst [vmem:[#allocation7] sm:$0xff] %v65
    %68 = vst [vmem:[#allocation7 + $0x8] sm:$0xff] %v66
    // Predicated region
    $region10: #{tpu_custom_call.1} parent=1 // pred_check
      _
    $region11: #{tpu_custom_call.1} parent=1 // pred_check_branch
      %70 = sbr.rel (0) target = $region13
    $region12: #{tpu_custom_call.1} parent=1 // pred_region
      %s72 = ssub.s32 256, 256
      %73 = vsyncadd [#allocation6], %s72
      %s74 = sshll.u32 [#allocation7], 4
      %s75 = int_to_ptr.vmem [resolvable:$true] %s74
      %80 = dma.vmem_to_hbm [thread:$0]  %s75, 256, %s2, [#allocation6], 128, 128, 8
    $region13: #{tpu_custom_call.1} parent=1 // pred_fallthru
      _
    // Predicated region
    $region14: #{tpu_custom_call.1} parent=1 // pred_check
      _
    $region15: #{tpu_custom_call.1} parent=1 // pred_check_branch
      %82 = sbr.rel (0) target = $region17
    $region16: #{tpu_custom_call.1} parent=1 // pred_region
      %83 = dma.done [#allocation6], 256
    $region17: #{tpu_custom_call.1} parent=1 // pred_fallthru
      _
    %84 = vsyncpa [#allocation5], 1
    %85 = vsyncpa [#allocation6], 1

</llo_original>
